<compile_context>
chip_gen: v7x
topology: tpu7x:2x2x1
jax: 0.10.0
libtpu: 0.0.40
codegen_flags: <defaults>
</compile_context>

<pallas_src>
import math

import jax
import jax.numpy as jnp
import numpy as np
from jax.experimental import pallas as pl
from jax.experimental.pallas import tpu as pltpu


# ------------------------------ fused Pallas kernel ---------------------------

def _make_fused_tcn_kernel(dims):
    """Whole TemporalConvNet in one kernel body.

    Ref order: (y0, w_stack, b_stack, out)
      y0      : (rows, N*F_in)     bf16  rows = (b, t) pairs in this block
      w_stack : (L+1, Kmax, Nmax)  bf16  block-banded conv mats + block-diag 1x1 downsample
      b_stack : (L+1, 1,    Nmax)  f32   per-layer biases tiled across N
      out     : (rows, N*C_last)   f32   lane-dense store, no reshape needed
    dims[i] = (N*Cin_i, N*Cout_i) is the live sub-slab of layer i (dims[-1] is
    the downsample).  All intermediate activations stay in VMEM / vregs.
    """
    n_layers = len(dims) - 1

    def kernel(x_ref, w_ref, b_ref, o_ref):
        y0 = x_ref[...]                                   # (rows, N*F_in) bf16
        h = y0
        for i in range(n_layers):
            k_i, n_i = dims[i]
            # One MXU matmul per layer: the causal dilated taps are baked into
            # the block-banded weight, so no roll / mask / lane-concat is needed
            # and causality is independent of how rows are grouped into blocks.
            z = jnp.dot(h, w_ref[i, :k_i, :n_i],
                        preferred_element_type=jnp.float32)
            a = jnp.maximum(z + b_ref[i, :, :n_i], 0.0)   # bias + ReLU in f32
            # dropout: identity at inference.
            # Keep inter-layer activations bf16 (halves vreg/VMEM pressure);
            # the residual add below wants the last layer in f32.
            h = a.astype(jnp.bfloat16) if i + 1 < n_layers else a

        # 1x1 downsample of the original input (block-diagonal matmul) +
        # residual add + final ReLU, fused into the same kernel.
        k_d, n_d = dims[-1]
        ds = jnp.dot(y0, w_ref[n_layers, :k_d, :n_d],
                     preferred_element_type=jnp.float32)
        o_ref[...] = jnp.maximum(h + ds + b_ref[n_layers, :, :n_d],
                                 0.0).astype(o_ref.dtype)

    return kernel


# ------------------------------ block sizing ----------------------------------

def _tpu_vmem_and_cores():
    """Generation-aware VMEM / TensorCore counts, with conservative fallbacks
    (v7x: 64 MiB per TC, 2 TCs)."""
    vmem = 64 * 1024 * 1024
    cores = 2
    try:
        info = pltpu.get_tpu_info()
        v = getattr(info, "vmem_capacity_bytes", None)
        if v:
            vmem = int(v)
        c = (getattr(info, "num_cores", None)
             or getattr(info, "num_tensorcores", None)
             or getattr(info, "tensorcores_per_chip", None))
        if c:
            cores = int(c)
    except Exception:
        pass
    return vmem, cores


def _row_bytes_estimate(dims):
    """Conservative per-row VMEM bytes (lane-padded, incl. double buffering)."""
    pad = lambda l: -(-l // 128) * 128
    in_lanes, out_lanes = dims[0][0], dims[-1][1]
    b = 2 * pad(in_lanes) * 2            # bf16 input block, double-buffered
    b += 2 * pad(out_lanes) * 4          # f32 output block, double-buffered
    b += pad(in_lanes) * 2               # y0 kept live for the residual branch
    for _, n in dims:
        b += pad(n) * 6                  # f32 matmul result + bf16 activation
    return b


def _pick_rows_per_block(bt, row_bytes, vmem_bytes, n_cores, align=16):
    """Rows per grid block: as large as a ~half-VMEM budget allows (per grid
    step costs ~0.35us, so bigger blocks amortize pipeline overhead), a divisor
    of bt, sublane-aligned (16 for the bf16 input block), and grid >= 2 only
    when the chip actually has >= 2 TensorCores."""
    budget = vmem_bytes // 2
    cap = max(align, budget // max(row_bytes, 1))
    divs = [d for d in range(1, bt + 1) if bt % d == 0]

    def cands(a):
        return [d for d in divs if (d % a == 0 or d == bt) and d <= cap]

    valid = cands(align) or cands(8) or [bt]
    min_grid = 2 if n_cores >= 2 else 1
    pref = [d for d in valid if bt // d >= min_grid]
    return max(pref) if pref else max(valid)


# ------------------------------ parameter init & packing ----------------------

def init_params(key, num_inputs, num_channels, kernel_size=2):
    """Deterministic re-creation of the module's parameters.
    Conv weights ~ N(0, 0.01); biases use PyTorch's default U(-1/sqrt(fan_in), .)."""
    params = []
    cin = num_inputs
    for cout in num_channels:
        key, kw, kb = jax.random.split(key, 3)
        w = jax.random.normal(kw, (cout, cin, 1, kernel_size), jnp.float32) * 0.01
        bound = 1.0 / math.sqrt(cin * 1 * kernel_size)
        b = jax.random.uniform(kb, (cout,), jnp.float32, -bound, bound)
        params.append((w, b))
        cin = cout
    down = None
    if num_inputs != num_channels[-1]:
        key, kw, kb = jax.random.split(key, 3)
        wd = jax.random.normal(kw, (num_channels[-1], num_inputs, 1, 1), jnp.float32) * 0.01
        bound = 1.0 / math.sqrt(num_inputs)
        bd = jax.random.uniform(kb, (num_channels[-1],), jnp.float32, -bound, bound)
        down = (wd, bd)
    return params, down


def pack_tcn_params(params, down, n_width):
    """ONE-TIME packing of the PyTorch-layout conv params into the kernel's
    lane-packed matmul form (done at init time, not per forward call).

    Layer i (dilation 2**i, kernel (1, K)) becomes a block-banded matrix with
    W[(n-(K-1-k)*2**i)*Cin : ..., n*Cout : ...] = w[:, :, 0, k].T ; causality /
    Chomp1d is encoded by omitting blocks whose source node index is negative.
    The 1x1 downsample becomes a block-diagonal matrix.  Everything is padded to
    a common (Kmax, Nmax) slab and stacked into ONE bf16 weight operand and ONE
    f32 bias operand (biases tiled across N).
    """
    if down is None:
        return None
    # TODO(synk): for large node counts (N*C beyond a few MXU tiles) switch to a
    # block-diagonal weight plus an in-kernel lane roll instead of the O((N*C)^2) band.
    mats, biases, dims = [], [], []
    for i, (w, b) in enumerate(params):
        cout, cin, _, ksz = w.shape
        d = 2 ** i
        wt = np.asarray(w)[:, :, 0, :]                      # (cout, cin, K)
        wb = np.zeros((n_width * cin, n_width * cout), np.float32)
        for n in range(n_width):
            for k in range(ksz):
                src = n - (ksz - 1 - k) * d
                if src < 0:
                    continue                                # causal zero padding
                wb[src * cin:(src + 1) * cin,
                   n * cout:(n + 1) * cout] += wt[:, :, k].T
        mats.append(wb)
        biases.append(np.tile(np.asarray(b), n_width))
        dims.append((n_width * cin, n_width * cout))

    wd, bd = down
    c_last, f_in = wd.shape[0], wd.shape[1]
    wdb = np.zeros((n_width * f_in, n_width * c_last), np.float32)
    wdt = np.asarray(wd)[:, :, 0, 0].T                      # (f_in, c_last)
    for n in range(n_width):
        wdb[n * f_in:(n + 1) * f_in, n * c_last:(n + 1) * c_last] = wdt
    mats.append(wdb)
    biases.append(np.tile(np.asarray(bd), n_width))
    dims.append((n_width * f_in, n_width * c_last))

    k_max = -(-max(k for k, _ in dims) // 16) * 16          # bf16 sublane tile
    n_max = -(-max(n for _, n in dims) // 128) * 128        # lane tile
    w_stack = np.zeros((len(mats), k_max, n_max), np.float32)
    b_stack = np.zeros((len(mats), 1, n_max), np.float32)
    for i, (m, bv) in enumerate(zip(mats, biases)):
        w_stack[i, :m.shape[0], :m.shape[1]] = m
        b_stack[i, 0, :bv.shape[0]] = bv
    return (jnp.asarray(w_stack, jnp.bfloat16),
            jnp.asarray(b_stack, jnp.float32),
            tuple(dims))


# ------------------------------ forward (Pallas) -------------------------------

def temporal_conv_net_forward(x, packed):
    """x: (B, N, T, F) -> (B, T, N, C_last).  Inference mode (dropout = identity)."""
    B, N, T, f_in = x.shape
    if packed is None:
        # Faithful to the reference ternary: when num_inputs == num_channels[-1]
        # the whole network is skipped and only ReLU(permuted input) is returned.
        return jnp.maximum(jnp.transpose(x, (0, 2, 1, 3)).astype(jnp.float32), 0.0)

    w_stack, b_stack, dims = packed
    in_lanes, out_lanes = dims[0][0], dims[-1][1]
    assert in_lanes == N * f_in
    c_last = out_lanes // N
    bt = B * T

    # Lane-packed input: rows = (b, t), lanes = (n, f).  One fused XLA
    # transpose+cast copy, written in bf16 so the extra HBM pass is half-width.
    # TODO(synk): fold this permute into the kernel's block DMA once F is wide
    # enough that a (bb, N, T, F) block isn't ~32x lane-padded (F=4 here).
    y0 = jnp.transpose(x, (0, 2, 1, 3)).reshape(bt, in_lanes).astype(jnp.bfloat16)

    vmem_bytes, n_cores = _tpu_vmem_and_cores()
    gb = _pick_rows_per_block(bt, _row_bytes_estimate(dims), vmem_bytes, n_cores)
    grid = (bt // gb,)

    out = pl.pallas_call(
        _make_fused_tcn_kernel(dims),
        out_shape=jax.ShapeDtypeStruct((bt, out_lanes), jnp.float32),
        grid=grid,
        in_specs=[
            pl.BlockSpec((gb, in_lanes), lambda i: (i, 0)),
            # Weights / biases: one stacked operand each with a constant block
            # index (no per-step re-DMA) instead of 2L+3 tiny per-layer operands.
            pl.BlockSpec(w_stack.shape, lambda i: (0, 0, 0)),
            pl.BlockSpec(b_stack.shape, lambda i: (0, 0, 0)),
        ],
        out_specs=pl.BlockSpec((gb, out_lanes), lambda i: (i, 0)),
        compiler_params=pltpu.CompilerParams(
            dimension_semantics=("parallel",),
            vmem_limit_bytes=int(vmem_bytes * 7 // 8)),
    )(y0, w_stack, b_stack)

    # Rows are (b, t) and lanes are (n, c): exactly PyTorch's final
    # permute(0, 2, 3, 1) layout, so this reshape is a free contiguous view.
    return out.reshape(B, T, N, c_last)


# ------------------------------ pure-JAX reference -----------------------------

def reference_forward(x, params, down, kernel_size=2):
    y0 = jnp.transpose(x, (0, 3, 2, 1)).astype(jnp.float32)     # (B, F, T, N) NCHW
    if down is None:
        return jnp.transpose(jax.nn.relu(y0), (0, 2, 3, 1))
    h = y0
    for i, (w, b) in enumerate(params):
        d = 2 ** i
        pad = (kernel_size - 1) * d
        out = jax.lax.conv_general_dilated(
            h, w, window_strides=(1, 1), padding=((0, 0), (pad, pad)),
            rhs_dilation=(1, d), dimension_numbers=("NCHW", "OIHW", "NCHW"))
        out = out + b[None, :, None, None]
        out = out[:, :, :, :-pad]                               # Chomp1d
        h = jax.nn.relu(out)                                    # dropout: identity (eval)
    wd, bd = down
    ds = jax.lax.conv_general_dilated(
        y0, wd, (1, 1), "VALID",
        dimension_numbers=("NCHW", "OIHW", "NCHW")) + bd[None, :, None, None]
    y = jax.nn.relu(h + ds)
    return jnp.transpose(y, (0, 2, 3, 1))


# ------------------------------ main -------------------------------------------

if __name__ == "__main__":
    key = jax.random.PRNGKey(0)
    B, N, T, F_in = 4, 16, 8, 4
    num_channels = [8, 8, 16]               # != F_in  =>  downsample branch is used

    kx, kp = jax.random.split(key)
    x = jax.random.normal(kx, (B, N, T, F_in), jnp.float32)
    params, down = init_params(kp, F_in, num_channels, kernel_size=2)
    packed = pack_tcn_params(params, down, N)      # one-time weight packing

    out = temporal_conv_net_forward(x, packed)
    out = jax.block_until_ready(out)

    ref = reference_forward(x, params, down)
    assert out.shape == (B, T, N, num_channels[-1])
    # bf16 matmul operands / inter-layer activations (f32 accumulation)
    # => loosened tolerance vs the f32 reference.
    np.testing.assert_allclose(np.asarray(out), np.asarray(ref), rtol=2e-2, atol=5e-3)

    print("KERNEL_OK")
</pallas_src>

<mosaic_0001>
module attributes {stable_mosaic.version = 11 : i64} {
  func.func @kernel(%arg0: i32, %arg1: memref<16x64xbf16, #tpu.memory_space<vmem>>, %arg2: memref<4x128x256xbf16, #tpu.memory_space<vmem>>, %arg3: memref<4x1x256xf32, #tpu.memory_space<vmem>>, %arg4: memref<16x256xf32, #tpu.memory_space<vmem>>) attributes {dimension_semantics = [#tpu.dimension_semantics<parallel>], iteration_bounds = array<i64: 2>, scalar_prefetch = 0 : i64, scratch_operands = 0 : i64, tpu.core_type = #tpu.core_type<tc>, window_params = [{transform_indices = @transform_0, window_bounds = array<i64: 16, 64>}, {pipeline_mode = #tpu.pipeline_mode<synchronous>, transform_indices = @transform_1, window_bounds = array<i64: 4, 128, 256>}, {pipeline_mode = #tpu.pipeline_mode<synchronous>, transform_indices = @transform_2, window_bounds = array<i64: 4, 1, 256>}, {transform_indices = @transform_3, window_bounds = array<i64: 16, 256>}]} {
    %c0 = arith.constant 0 : index
    %c0_0 = arith.constant 0 : index
    %0 = vector.load %arg1[%c0, %c0_0] : memref<16x64xbf16, #tpu.memory_space<vmem>>, vector<16x64xbf16>
    %c0_1 = arith.constant 0 : index
    %c0_2 = arith.constant 0 : index
    %c0_3 = arith.constant 0 : index
    %1 = vector.load %arg2[%c0_1, %c0_2, %c0_3] : memref<4x128x256xbf16, #tpu.memory_space<vmem>>, vector<1x64x128xbf16>
    %2 = vector.shape_cast %1 : vector<1x64x128xbf16> to vector<64x128xbf16>
    %cst = arith.constant dense<0.000000e+00> : vector<16x128xf32>
    %3 = tpu.matmul %0, %2, %cst {dimension_numbers = #tpu.dot_dimension_numbers<[1], [0], [0], [1], [0, 0, 1, 1], [], []>} : vector<16x64xbf16>, vector<64x128xbf16>, vector<16x128xf32> -> vector<16x128xf32>
    %c0_4 = arith.constant 0 : index
    %c0_5 = arith.constant 0 : index
    %c0_6 = arith.constant 0 : index
    %4 = vector.load %arg3[%c0_4, %c0_5, %c0_6] : memref<4x1x256xf32, #tpu.memory_space<vmem>>, vector<1x1x128xf32>
    %5 = vector.shape_cast %4 : vector<1x1x128xf32> to vector<1x128xf32>
    %6 = vector.broadcast %5 : vector<1x128xf32> to vector<16x128xf32>
    %7 = arith.addf %3, %6 : vector<16x128xf32>
    %cst_7 = arith.constant 0.000000e+00 : f32
    %8 = vector.broadcast %cst_7 : f32 to vector<16x128xf32>
    %9 = arith.maximumf %7, %8 : vector<16x128xf32>
    %10 = arith.truncf %9 : vector<16x128xf32> to vector<16x128xbf16>
    %c1 = arith.constant 1 : index
    %c0_8 = arith.constant 0 : index
    %c0_9 = arith.constant 0 : index
    %11 = vector.load %arg2[%c1, %c0_8, %c0_9] : memref<4x128x256xbf16, #tpu.memory_space<vmem>>, vector<1x128x128xbf16>
    %12 = vector.shape_cast %11 : vector<1x128x128xbf16> to vector<128x128xbf16>
    %cst_10 = arith.constant dense<0.000000e+00> : vector<16x128xf32>
    %13 = tpu.matmul %10, %12, %cst_10 {dimension_numbers = #tpu.dot_dimension_numbers<[1], [0], [0], [1], [0, 0, 1, 1], [], []>} : vector<16x128xbf16>, vector<128x128xbf16>, vector<16x128xf32> -> vector<16x128xf32>
    %c1_11 = arith.constant 1 : index
    %c0_12 = arith.constant 0 : index
    %c0_13 = arith.constant 0 : index
    %14 = vector.load %arg3[%c1_11, %c0_12, %c0_13] : memref<4x1x256xf32, #tpu.memory_space<vmem>>, vector<1x1x128xf32>
    %15 = vector.shape_cast %14 : vector<1x1x128xf32> to vector<1x128xf32>
    %16 = vector.broadcast %15 : vector<1x128xf32> to vector<16x128xf32>
    %17 = arith.addf %13, %16 : vector<16x128xf32>
    %cst_14 = arith.constant 0.000000e+00 : f32
    %18 = vector.broadcast %cst_14 : f32 to vector<16x128xf32>
    %19 = arith.maximumf %17, %18 : vector<16x128xf32>
    %20 = arith.truncf %19 : vector<16x128xf32> to vector<16x128xbf16>
    %c2 = arith.constant 2 : index
    %c0_15 = arith.constant 0 : index
    %c0_16 = arith.constant 0 : index
    %21 = vector.load %arg2[%c2, %c0_15, %c0_16] : memref<4x128x256xbf16, #tpu.memory_space<vmem>>, vector<1x128x256xbf16>
    %22 = vector.shape_cast %21 : vector<1x128x256xbf16> to vector<128x256xbf16>
    %cst_17 = arith.constant dense<0.000000e+00> : vector<16x256xf32>
    %23 = tpu.matmul %20, %22, %cst_17 {dimension_numbers = #tpu.dot_dimension_numbers<[1], [0], [0], [1], [0, 0, 1, 1], [], []>} : vector<16x128xbf16>, vector<128x256xbf16>, vector<16x256xf32> -> vector<16x256xf32>
    %c2_18 = arith.constant 2 : index
    %c0_19 = arith.constant 0 : index
    %c0_20 = arith.constant 0 : index
    %24 = vector.load %arg3[%c2_18, %c0_19, %c0_20] : memref<4x1x256xf32, #tpu.memory_space<vmem>>, vector<1x1x256xf32>
    %25 = vector.shape_cast %24 : vector<1x1x256xf32> to vector<1x256xf32>
    %26 = vector.broadcast %25 : vector<1x256xf32> to vector<16x256xf32>
    %27 = arith.addf %23, %26 : vector<16x256xf32>
    %cst_21 = arith.constant 0.000000e+00 : f32
    %28 = vector.broadcast %cst_21 : f32 to vector<16x256xf32>
    %29 = arith.maximumf %27, %28 : vector<16x256xf32>
    %c3 = arith.constant 3 : index
    %c0_22 = arith.constant 0 : index
    %c0_23 = arith.constant 0 : index
    %30 = vector.load %arg2[%c3, %c0_22, %c0_23] : memref<4x128x256xbf16, #tpu.memory_space<vmem>>, vector<1x64x256xbf16>
    %31 = vector.shape_cast %30 : vector<1x64x256xbf16> to vector<64x256xbf16>
    %cst_24 = arith.constant dense<0.000000e+00> : vector<16x256xf32>
    %32 = tpu.matmul %0, %31, %cst_24 {dimension_numbers = #tpu.dot_dimension_numbers<[1], [0], [0], [1], [0, 0, 1, 1], [], []>} : vector<16x64xbf16>, vector<64x256xbf16>, vector<16x256xf32> -> vector<16x256xf32>
    %33 = arith.addf %29, %32 : vector<16x256xf32>
    %c3_25 = arith.constant 3 : index
    %c0_26 = arith.constant 0 : index
    %c0_27 = arith.constant 0 : index
    %34 = vector.load %arg3[%c3_25, %c0_26, %c0_27] : memref<4x1x256xf32, #tpu.memory_space<vmem>>, vector<1x1x256xf32>
    %35 = vector.shape_cast %34 : vector<1x1x256xf32> to vector<1x256xf32>
    %36 = vector.broadcast %35 : vector<1x256xf32> to vector<16x256xf32>
    %37 = arith.addf %33, %36 : vector<16x256xf32>
    %cst_28 = arith.constant 0.000000e+00 : f32
    %38 = vector.broadcast %cst_28 : f32 to vector<16x256xf32>
    %39 = arith.maximumf %37, %38 : vector<16x256xf32>
    %c0_29 = arith.constant 0 : index
    %c0_30 = arith.constant 0 : index
    %40 = vector.load %arg4[%c0_29, %c0_30] : memref<16x256xf32, #tpu.memory_space<vmem>>, vector<16x256xf32>
    tpu.vector_store %arg4[%c0_29, %c0_30], %39 {strides = array<i32>} : memref<16x256xf32, #tpu.memory_space<vmem>>, vector<16x256xf32>,
    return
  }
  func.func @transform_0(%arg0: i32) -> (i32, i32) {
    %c0_i32 = arith.constant 0 : i32
    %c0_i32_0 = arith.constant 0 : i32
    return %arg0, %c0_i32 : i32, i32
  }
  func.func @transform_1(%arg0: i32) -> (i32, i32, i32) {
    %c0_i32 = arith.constant 0 : i32
    %c0_i32_0 = arith.constant 0 : i32
    %c0_i32_1 = arith.constant 0 : i32
    %c0_i32_2 = arith.constant 0 : i32
    return %c0_i32, %c0_i32_0, %c0_i32_1 : i32, i32, i32
  }
  func.func @transform_2(%arg0: i32) -> (i32, i32, i32) {
    %c0_i32 = arith.constant 0 : i32
    %c0_i32_0 = arith.constant 0 : i32
    %c0_i32_1 = arith.constant 0 : i32
    %c0_i32_2 = arith.constant 0 : i32
    return %c0_i32, %c0_i32_0, %c0_i32_1 : i32, i32, i32
  }
  func.func @transform_3(%arg0: i32) -> (i32, i32) {
    %c0_i32 = arith.constant 0 : i32
    %c0_i32_0 = arith.constant 0 : i32
    return %arg0, %c0_i32 : i32, i32
  }
}

</mosaic_0001>

<llo_original>
// kernel: tpu_custom_call.1
$region0: #{tpu_custom_call.1}
  #allocation0 [shape = 'u32[]', space=smem, size = 0x4, offset = 0x4, fixed_abs, tag = 'smem constant byte address 0x4 - core index']
  #allocation1 [shape = 'u32[144,128]{1,0:T(1,128)}', space=vmem, size = 0x12000, scoped, tag = 'internal scratch']
  %s0 = inlined_call_operand.hbm [shape: bf16[32,64], index: 0, kind: input, shape index: {}]
  %s1 = inlined_call_operand.hbm [shape: bf16[4,128,256], index: 1, kind: input, shape index: {}]
  %s2 = inlined_call_operand.hbm [shape: f32[4,1,256], index: 2, kind: input, shape index: {}]
  %s3 = inlined_call_operand.hbm [shape: f32[32,256], index: 3, kind: output, shape index: {}]
  %s4 = sld [smem:[#allocation0]]
  $region57: #{tpu_custom_call.1} parent=0
    _
  %s6 = ssub.s32 1, %s4
  %s7 = scalar_select 0, %s6, %s4
  $region1: #{tpu_custom_call.1} parent=0
    #allocation2 [shape = 'u8[8192]{0}', space=vmem, size = 0x2000, scoped, tag = 'input window, operand 0']
    #allocation3 [shape = 's32[2]{0}', space=sflag, size = 0x8, scoped, tag = 'scoped memory for tpu_custom_call.1']
    #allocation4 [shape = 's32[2]{0}', space=sflag, size = 0x8, scoped, tag = 'scoped memory for tpu_custom_call.1']
    #allocation5 [shape = 'u8[262144]{0}', space=vmem, size = 0x40000, scoped, tag = 'input window, operand 1, single buffered']
    #allocation6 [shape = 's32[1]{0}', space=sflag, size = 0x4, scoped, tag = 'scoped memory for tpu_custom_call.1']
    #allocation7 [shape = 'u8[4096]{0}', space=vmem, size = 0x1000, scoped, tag = 'input window, operand 2, single buffered']
    #allocation8 [shape = 'u8[32768]{0}', space=vmem, size = 0x8000, scoped, tag = 'output window, operand 0']
    %8 = vsyncpa [#allocation3], 0
    %s9 = scalar_lea.sflag [#allocation3], 1
    %10 = vsyncpa %s9, 0
    %11 = vsyncpa [#allocation6], 0
    %12 = vsyncpa [#allocation4], 0
    %s13 = scalar_lea.sflag [#allocation4], 1
    %14 = vsyncpa %s13, 0
    loop: start=0, step=1, limit=4
    $region2: #{tpu_custom_call.1} parent=1 // loop_pre_header
      _
    $region3: #{tpu_custom_call.1} parent=1 // loop_header
      %s16 = sphi 0, %s20
      %p17 = scmp.ge.s32.totalorder %s16, 4
      %s26 = sphi 0, %s28
      %s29 = sphi 0, %s26
      %s30 = sphi 0, %s29
      %s46 = sphi 0, %s30
      %s50 = sphi 0, %s50
      %s52 = sphi 0, %s50
      %s53 = sphi 0, %s52
      %s67 = sphi 0, %s53
      %s71 = sphi 0, %s71
      %s73 = sphi 0, %s71
      %s74 = sphi 0, %s73
      %s88 = sphi 0, %s74
      %s94 = sphi 0, %s96
      %s97 = sphi 0, %s94
      %s98 = sphi 0, %s97
      %s114 = sphi 0, %s98
    $region4: #{tpu_custom_call.1} parent=1 // loop_header_branch
      %19 = sbr.rel (%p17) target = $region8
    $region5: #{tpu_custom_call.1} parent=1 // loop_body
      %s21 = ssub.s32 %s16, 1
      %s22 = ssub.s32 %s16, 2
      %s23 = sadd.s32 %s16, 1
      %s24 = ssub.s32 %s16, %s23
      %p25 = scmp.eq.s32.totalorder %s24, 0
      %s27 = sadd.s32 %s26, 1
      %s28 = scalar_select %p25, %s26, %s27
      %p31 = pneg %p25
      %p32 = scmp.eq.s32.totalorder %s16, 1
      %p33 = por %p31, %p32
      %p34 = scmp.ne.s32.totalorder %s26, %s29
      %p35 = scmp.eq.s32.totalorder %s16, 0
      %p36 = por %p34, %p35
      %p37 = scmp.ne.s32.totalorder %s26, %s29
      %p38 = scmp.eq.s32.totalorder %s21, 1
      %p39 = por %p37, %p38
      %p40 = scmp.ne.s32.totalorder %s29, %s30
      %p41 = scmp.eq.s32.totalorder %s21, 0
      %p42 = por %p40, %p41
      %p43 = scmp.ne.s32.totalorder %s29, %s30
      %p44 = scmp.eq.s32.totalorder %s22, 1
      %p45 = por %p43, %p44
      %p47 = scmp.ne.s32.totalorder %s30, %s46
      %p48 = scmp.eq.s32.totalorder %s22, 0
      %p49 = por %p47, %p48
      %s51 = sadd.s32 %s50, 1
      %p54 = scmp.eq.s32.totalorder %s16, 1
      %p55 = scmp.ne.s32.totalorder %s50, %s52
      %p56 = scmp.eq.s32.totalorder %s16, 0
      %p57 = por %p55, %p56
      %p58 = scmp.ne.s32.totalorder %s50, %s52
      %p59 = scmp.eq.s32.totalorder %s21, 1
      %p60 = por %p58, %p59
      %p61 = scmp.ne.s32.totalorder %s52, %s53
      %p62 = scmp.eq.s32.totalorder %s21, 0
      %p63 = por %p61, %p62
      %p64 = scmp.ne.s32.totalorder %s52, %s53
      %p65 = scmp.eq.s32.totalorder %s22, 1
      %p66 = por %p64, %p65
      %p68 = scmp.ne.s32.totalorder %s53, %s67
      %p69 = scmp.eq.s32.totalorder %s22, 0
      %p70 = por %p68, %p69
      %s72 = sadd.s32 %s71, 1
      %p75 = scmp.eq.s32.totalorder %s16, 1
      %p76 = scmp.ne.s32.totalorder %s71, %s73
      %p77 = scmp.eq.s32.totalorder %s16, 0
      %p78 = por %p76, %p77
      %p79 = scmp.ne.s32.totalorder %s71, %s73
      %p80 = scmp.eq.s32.totalorder %s21, 1
      %p81 = por %p79, %p80
      %p82 = scmp.ne.s32.totalorder %s73, %s74
      %p83 = scmp.eq.s32.totalorder %s21, 0
      %p84 = por %p82, %p83
      %p85 = scmp.ne.s32.totalorder %s73, %s74
      %p86 = scmp.eq.s32.totalorder %s22, 1
      %p87 = por %p85, %p86
      %p89 = scmp.ne.s32.totalorder %s74, %s88
      %p90 = scmp.eq.s32.totalorder %s22, 0
      %p91 = por %p89, %p90
      %s92 = ssub.s32 %s16, %s23
      %p93 = scmp.eq.s32.totalorder %s92, 0
      %s95 = sadd.s32 %s94, 1
      %s96 = scalar_select %p93, %s94, %s95
      %p99 = pneg %p93
      %p100 = scmp.eq.s32.totalorder %s16, 1
      %p101 = por %p99, %p100
      %p102 = scmp.ne.s32.totalorder %s94, %s97
      %p103 = scmp.eq.s32.totalorder %s16, 0
      %p104 = por %p102, %p103
      %p105 = scmp.ne.s32.totalorder %s94, %s97
      %p106 = scmp.eq.s32.totalorder %s21, 1
      %p107 = por %p105, %p106
      %p108 = scmp.ne.s32.totalorder %s97, %s98
      %p109 = scmp.eq.s32.totalorder %s21, 0
      %p110 = por %p108, %p109
      %p111 = scmp.ne.s32.totalorder %s97, %s98
      %p112 = scmp.eq.s32.totalorder %s22, 1
      %p113 = por %p111, %p112
      %p115 = scmp.ne.s32.totalorder %s98, %s114
      %p116 = scmp.eq.s32.totalorder %s22, 0
      %p117 = por %p115, %p116
      %p118 = scmp.le.s32.totalorder 1, %s16
      %p119 = scmp.lt.s32.totalorder %s16, 3
      %p120 = pnand %p118, %p119
      %p121 = pneg %p120
      // Predicated region
      $region9: #{tpu_custom_call.1} parent=5 // pred_check
        _
      $region10: #{tpu_custom_call.1} parent=5 // pred_check_branch
        %123 = sbr.rel (%p120) target = $region12
      $region11: #{tpu_custom_call.1} parent=5 // pred_region
        %s124 = ssub.s32 %s16, 1
        // Predicated region
        $region13: #{tpu_custom_call.1} parent=11 // pred_check
          %p125 = pneg %p63
        $region14: #{tpu_custom_call.1} parent=11 // pred_check_branch
          %127 = sbr.rel (%p125) target = $region16
        $region15: #{tpu_custom_call.1} parent=11 // pred_region
          %s129 = ssub.s32 8192, 8192
          %130 = vsyncadd [#allocation6], %s129
          %s131 = sshll.u32 [#allocation5], 4
          %s132 = int_to_ptr.vmem [resolvable:$true] %s131
          %137 = dma.hbm_to_vmem [thread:$0]  %s1, 8192, %s132, [#allocation6], 128, 128, 8
        $region16: #{tpu_custom_call.1} parent=11 // pred_fallthru
          _
        // Predicated region
        $region17: #{tpu_custom_call.1} parent=11 // pred_check
          %p138 = pneg %p84
        $region18: #{tpu_custom_call.1} parent=11 // pred_check_branch
          %140 = sbr.rel (%p138) target = $region20
        $region19: #{tpu_custom_call.1} parent=11 // pred_region
          %s142 = ssub.s32 128, 128
          %143 = vsyncadd [#allocation6], %s142
          %s144 = sshll.u32 [#allocation7], 4
          %s145 = int_to_ptr.vmem [resolvable:$true] %s144
          %150 = dma.hbm_to_vmem [thread:$0]  %s2, 128, %s145, [#allocation6], 32, 32, 2
        $region20: #{tpu_custom_call.1} parent=11 // pred_fallthru
          _
      $region12: #{tpu_custom_call.1} parent=5 // pred_fallthru
        _
      %p151 = scmp.lt.s32.totalorder %s16, 2
      // Predicated region
      $region21: #{tpu_custom_call.1} parent=5 // pred_check
        %p152 = pneg %p151
      $region22: #{tpu_custom_call.1} parent=5 // pred_check_branch
        %154 = sbr.rel (%p152) target = $region24
      $region23: #{tpu_custom_call.1} parent=5 // pred_region
        // Predicated region
        $region25: #{tpu_custom_call.1} parent=23 // pred_check
          %p155 = pneg %p36
        $region26: #{tpu_custom_call.1} parent=23 // pred_check_branch
          %157 = sbr.rel (%p155) target = $region28
        $region27: #{tpu_custom_call.1} parent=23 // pred_region
          %s158 = sand.u32 %s26, 1
          %s159 = scalar_lea.sflag [#allocation3], %s158
          %s160 = sand.u32 %s26, 1
          %s161 = smul.addr %s160, 8
          %s162 = scalar_lea.vmem [#allocation2], %s161
          %s163 = smul.u32 2, %s16
          %s165 = ssub.s32 128, 128
          %166 = vsyncadd %s159, %s165
          %s167 = smul.addr %s163, 64
          %s168 = scalar_lea.hbm %s0, %s167
          %s169 = sshll.u32 %s162, 4
          %s170 = int_to_ptr.vmem [resolvable:$true] %s169
          %175 = dma.hbm_to_vmem [thread:$0]  %s168, 128, %s170, %s159, 64, 64, 4
        $region28: #{tpu_custom_call.1} parent=23 // pred_fallthru
          _
      $region24: #{tpu_custom_call.1} parent=5 // pred_fallthru
        _
      %p176 = scmp.le.s32.totalorder 1, %s16
      %p177 = scmp.lt.s32.totalorder %s16, 3
      %p178 = pnand %p176, %p177
      %p179 = pneg %p178
      // Predicated region
      $region29: #{tpu_custom_call.1} parent=5 // pred_check
        _
      $region30: #{tpu_custom_call.1} parent=5 // pred_check_branch
        %181 = sbr.rel (%p178) target = $region32
      $region31: #{tpu_custom_call.1} parent=5 // pred_region
        %s182 = ssub.s32 %s16, 1
        %s183 = sand.u32 %s29, 1
        %s184 = scalar_lea.sflag [#allocation3], %s183
        %s185 = sand.u32 %s29, 1
        %s186 = smul.addr %s185, 8
        %s187 = scalar_lea.vmem [#allocation2], %s186
        // Predicated region
        $region33: #{tpu_custom_call.1} parent=31 // pred_check
          %p188 = pneg %p42
        $region34: #{tpu_custom_call.1} parent=31 // pred_check_branch
          %190 = sbr.rel (%p188) target = $region36
        $region35: #{tpu_custom_call.1} parent=31 // pred_region
          %191 = dma.done %s184, 128
        $region36: #{tpu_custom_call.1} parent=31 // pred_fallthru
          _
        // Predicated region
        $region37: #{tpu_custom_call.1} parent=31 // pred_check
          %p192 = pneg %p63
        $region38: #{tpu_custom_call.1} parent=31 // pred_check_branch
          %194 = sbr.rel (%p192) target = $region40
        $region39: #{tpu_custom_call.1} parent=31 // pred_region
          %195 = dma.done [#allocation6], 8192
        $region40: #{tpu_custom_call.1} parent=31 // pred_fallthru
          _
        // Predicated region
        $region41: #{tpu_custom_call.1} parent=31 // pred_check
          %p196 = pneg %p84
        $region42: #{tpu_custom_call.1} parent=31 // pred_check_branch
          %198 = sbr.rel (%p196) target = $region44
        $region43: #{tpu_custom_call.1} parent=31 // pred_region
          %199 = dma.done [#allocation6], 128
        $region44: #{tpu_custom_call.1} parent=31 // pred_fallthru
          _
        %s200 = sand.u32 %s29, 1
        %s201 = scalar_lea.sflag [#allocation3], %s200
        %s202 = sand.u32 %s29, 1
        %s203 = smul.addr %s202, 8
        %s204 = scalar_lea.vmem [#allocation2], %s203
        %p205 = pneg %p42
        %p206 = pneg %p39
        %p207 = pneg %p63
        %p208 = pneg %p60
        %p209 = pneg %p84
        %p210 = pneg %p81
        %p211 = pneg %p110
        %p212 = pneg %p107
        %s213 = sand.u32 %s97, 1
        %s214 = scalar_lea.sflag [#allocation4], %s213
        %s215 = sand.u32 %s97, 1
        %s216 = smul.addr %s215, 32
        %s217 = scalar_lea.vmem [#allocation8], %s216
        %s218 = smul.u32 2, %s21
        %s219 = smul.u32 2, %s21
        %v221 = vld [vmem:[%s187] sm:$0xf]
        %v222 = vld [vmem:[%s187 + $0x4] sm:$0xf]
        %v223 = vld [vmem:[#allocation5] sm:$0xf]
        %v224 = vld [vmem:[#allocation5 + $0x8] sm:$0xf]
        %v225 = vld [vmem:[#allocation5 + $0x10] sm:$0xf]
        %v226 = vld [vmem:[#allocation5 + $0x18] sm:$0xf]
        %v227 = vld [vmem:[#allocation5 + $0x20] sm:$0xf]
        %v228 = vld [vmem:[#allocation5 + $0x28] sm:$0xf]
        %v229 = vld [vmem:[#allocation5 + $0x30] sm:$0xf]
        %v230 = vld [vmem:[#allocation5 + $0x38] sm:$0xf]
        %v231 = vld [vmem:[#allocation7] sm:$0x1]
        %v233 = vlaneseq
        %v234 = vshrl.u32 %v233, 7
        %v235 = vsub.s32 0, %v234
        %v236 = vrot.slane %v231, %v235
        %v240 = vunpack.c.l.b16 %v221
        %v241 = vunpack.c.l.b16 %v222
        %v242 = vpack.c.b16 %v241, %v240
        %v251 = vunpack.c.l.b16 %v223
        %v252 = vunpack.c.l.b16 %v224
        %v253 = vunpack.c.l.b16 %v225
        %v254 = vunpack.c.l.b16 %v226
        %v255 = vunpack.c.l.b16 %v227
        %v256 = vunpack.c.l.b16 %v228
        %v257 = vunpack.c.l.b16 %v229
        %v258 = vunpack.c.l.b16 %v230
        %v259 = vpack.c.b16 %v252, %v251
        %v260 = vpack.c.b16 %v254, %v253
        %v261 = vpack.c.b16 %v256, %v255
        %v262 = vpack.c.b16 %v258, %v257
        %vm267 = vcmask 523264
        %v269 = vsel %vm267, %v242, 0
        %271 = vmatprep.subr.bf16.mxu0 0
        %272 = vmatpush1.bf16.msra.mxu0 %v259
        %273 = vmatprep.subr.bf16.mxu0 0
        %274 = vmatpush1.bf16.msra.mxu0 %v260
        %275 = vmatprep.subr.bf16.mxu0 0
        %276 = vmatpush1.bf16.msra.mxu0 %v261
        %277 = vmatprep.subr.bf16.mxu0 0
        %278 = vmatpush1.bf16.msra.mxu0 %v262
        %279 = vmatprep.subr.bf16.mxu0 0
        %280 = vmatpush1.bf16.msra.mxu0 0
        %281 = vmatprep.subr.bf16.mxu0 0
        %282 = vmatpush1.bf16.msra.mxu0 0
        %283 = vmatprep.subr.bf16.mxu0 0
        %284 = vmatpush1.bf16.msra.mxu0 0
        %285 = vmatprep.subr.bf16.mxu0 0
        %286 = vmatpush1.bf16.msra.mxu0 0
        %287 = vmatprep.subr.bf16.mxu0 0
        %288 = vmatpush1.bf16.msra.mxu0 0
        %289 = vmatprep.subr.bf16.mxu0 0
        %290 = vmatpush1.bf16.msra.mxu0 0
        %291 = vmatprep.subr.bf16.mxu0 0
        %292 = vmatpush1.bf16.msra.mxu0 0
        %293 = vmatprep.subr.bf16.mxu0 0
        %294 = vmatpush1.bf16.msra.mxu0 0
        %295 = vmatprep.subr.bf16.mxu0 0
        %296 = vmatpush1.bf16.msra.mxu0 0
        %297 = vmatprep.subr.bf16.mxu0 0
        %298 = vmatpush1.bf16.msra.mxu0 0
        %299 = vmatprep.subr.bf16.mxu0 0
        %300 = vmatpush1.bf16.msra.mxu0 0
        %301 = vmatprep.subr.bf16.mxu0 0
        %302 = vmatpush1.bf16.msra.mxu0 0
        %303 = vmatprep.mubr.bf16.mxu0 0
        %304 = vmatmul.mubr.bf16.gmra.mrb[0].mxu0 %v269
        %v305 = vpop.f32.mrb[0].mxu0
        %v306 = vadd.f32 %v236, %v305
        %v307 = vpop.f32.mrb[0].mxu0
        %v308 = vpop.f32.mrb[0].mxu0
        %v309 = vadd.f32 %v236, %v308
        %v310 = vpop.f32.mrb[0].mxu0
        %311 = vdwg.mxu0
        %v312 = vmax.f32 %v306, 0.0
        %v313 = vmax.f32 %v309, 0.0
        %v314 = vpack.c.bf16 %v313, %v312
        %s315 = scalar_lea.vmem [#allocation5], 128
        %v316 = vld [vmem:[%s315] sm:$0xf]
        %v317 = vld [vmem:[%s315 + $0x8] sm:$0xf]
        %v318 = vld [vmem:[%s315 + $0x10] sm:$0xf]
        %v319 = vld [vmem:[%s315 + $0x18] sm:$0xf]
        %v320 = vld [vmem:[%s315 + $0x20] sm:$0xf]
        %v321 = vld [vmem:[%s315 + $0x28] sm:$0xf]
        %v322 = vld [vmem:[%s315 + $0x30] sm:$0xf]
        %v323 = vld [vmem:[%s315 + $0x38] sm:$0xf]
        %v324 = vld [vmem:[%s315 + $0x40] sm:$0xf]
        %v325 = vld [vmem:[%s315 + $0x48] sm:$0xf]
        %v326 = vld [vmem:[%s315 + $0x50] sm:$0xf]
        %v327 = vld [vmem:[%s315 + $0x58] sm:$0xf]
        %v328 = vld [vmem:[%s315 + $0x60] sm:$0xf]
        %v329 = vld [vmem:[%s315 + $0x68] sm:$0xf]
        %v330 = vld [vmem:[%s315 + $0x70] sm:$0xf]
        %v331 = vld [vmem:[%s315 + $0x78] sm:$0xf]
        %s332 = scalar_lea.vmem [#allocation7], 2
        %v333 = vld [vmem:[%s332] sm:$0x1]
        %v335 = vlaneseq
        %v336 = vshrl.u32 %v335, 7
        %v337 = vsub.s32 0, %v336
        %v338 = vrot.slane %v333, %v337
        %v356 = vunpack.c.l.b16 %v316
        %v357 = vunpack.c.l.b16 %v317
        %v358 = vunpack.c.l.b16 %v318
        %v359 = vunpack.c.l.b16 %v319
        %v360 = vunpack.c.l.b16 %v320
        %v361 = vunpack.c.l.b16 %v321
        %v362 = vunpack.c.l.b16 %v322
        %v363 = vunpack.c.l.b16 %v323
        %v364 = vunpack.c.l.b16 %v324
        %v365 = vunpack.c.l.b16 %v325
        %v366 = vunpack.c.l.b16 %v326
        %v367 = vunpack.c.l.b16 %v327
        %v368 = vunpack.c.l.b16 %v328
        %v369 = vunpack.c.l.b16 %v329
        %v370 = vunpack.c.l.b16 %v330
        %v371 = vunpack.c.l.b16 %v331
        %v372 = vpack.c.b16 %v357, %v356
        %v373 = vpack.c.b16 %v359, %v358
        %v374 = vpack.c.b16 %v361, %v360
        %v375 = vpack.c.b16 %v363, %v362
        %v376 = vpack.c.b16 %v365, %v364
        %v377 = vpack.c.b16 %v367, %v366
        %v378 = vpack.c.b16 %v369, %v368
        %v379 = vpack.c.b16 %v371, %v370
        %388 = vmatprep.subr.bf16.mxu0 0
        %389 = vmatpush1.bf16.msra.mxu0 %v372
        %390 = vmatprep.subr.bf16.mxu0 0
        %391 = vmatpush1.bf16.msra.mxu0 %v373
        %392 = vmatprep.subr.bf16.mxu0 0
        %393 = vmatpush1.bf16.msra.mxu0 %v374
        %394 = vmatprep.subr.bf16.mxu0 0
        %395 = vmatpush1.bf16.msra.mxu0 %v375
        %396 = vmatprep.subr.bf16.mxu0 0
        %397 = vmatpush1.bf16.msra.mxu0 %v376
        %398 = vmatprep.subr.bf16.mxu0 0
        %399 = vmatpush1.bf16.msra.mxu0 %v377
        %400 = vmatprep.subr.bf16.mxu0 0
        %401 = vmatpush1.bf16.msra.mxu0 %v378
        %402 = vmatprep.subr.bf16.mxu0 0
        %403 = vmatpush1.bf16.msra.mxu0 %v379
        %404 = vmatprep.subr.bf16.mxu0 0
        %405 = vmatpush1.bf16.msra.mxu0 0
        %406 = vmatprep.subr.bf16.mxu0 0
        %407 = vmatpush1.bf16.msra.mxu0 0
        %408 = vmatprep.subr.bf16.mxu0 0
        %409 = vmatpush1.bf16.msra.mxu0 0
        %410 = vmatprep.subr.bf16.mxu0 0
        %411 = vmatpush1.bf16.msra.mxu0 0
        %412 = vmatprep.subr.bf16.mxu0 0
        %413 = vmatpush1.bf16.msra.mxu0 0
        %414 = vmatprep.subr.bf16.mxu0 0
        %415 = vmatpush1.bf16.msra.mxu0 0
        %416 = vmatprep.subr.bf16.mxu0 0
        %417 = vmatpush1.bf16.msra.mxu0 0
        %418 = vmatprep.subr.bf16.mxu0 0
        %419 = vmatpush1.bf16.msra.mxu0 0
        %420 = vmatprep.mubr.bf16.mxu0 0
        %421 = vmatmul.mubr.bf16.gmra.mrb[0].mxu0 %v314
        %v422 = vpop.f32.mrb[0].mxu0
        %v423 = vadd.f32 %v338, %v422
        %v424 = vpop.f32.mrb[0].mxu0
        %v425 = vpop.f32.mrb[0].mxu0
        %v426 = vadd.f32 %v338, %v425
        %v427 = vpop.f32.mrb[0].mxu0
        %428 = vdwg.mxu0
        %v429 = vmax.f32 %v423, 0.0
        %v430 = vmax.f32 %v426, 0.0
        %v431 = vpack.c.bf16 %v430, %v429
        %s432 = scalar_lea.vmem [#allocation5], 256
        %v433 = vld [vmem:[%s432] sm:$0xff]
        %v434 = vld [vmem:[%s432 + $0x8] sm:$0xff]
        %v435 = vld [vmem:[%s432 + $0x10] sm:$0xff]
        %v436 = vld [vmem:[%s432 + $0x18] sm:$0xff]
        %v437 = vld [vmem:[%s432 + $0x20] sm:$0xff]
        %v438 = vld [vmem:[%s432 + $0x28] sm:$0xff]
        %v439 = vld [vmem:[%s432 + $0x30] sm:$0xff]
        %v440 = vld [vmem:[%s432 + $0x38] sm:$0xff]
        %v441 = vld [vmem:[%s432 + $0x40] sm:$0xff]
        %v442 = vld [vmem:[%s432 + $0x48] sm:$0xff]
        %v443 = vld [vmem:[%s432 + $0x50] sm:$0xff]
        %v444 = vld [vmem:[%s432 + $0x58] sm:$0xff]
        %v445 = vld [vmem:[%s432 + $0x60] sm:$0xff]
        %v446 = vld [vmem:[%s432 + $0x68] sm:$0xff]
        %v447 = vld [vmem:[%s432 + $0x70] sm:$0xff]
        %v448 = vld [vmem:[%s432 + $0x78] sm:$0xff]
        %s449 = scalar_lea.vmem [#allocation7], 4
        %v450 = vld [vmem:[%s449] sm:$0x3]
        %v452 = vlaneseq
        %v453 = vshrl.u32 %v452, 7
        %v454 = vsub.s32 0, %v453
        %v455 = vrot.slane %v450, %v454
        %v456 = vlaneseq
        %v457 = vshrl.u32 %v456, 7
        %v458 = vsub.s32 1, %v457
        %v459 = vrot.slane %v450, %v458
        %v478 = vunpack.c.l.b16 %v433
        %v479 = vunpack.c.h.b16 %v433
        %v480 = vunpack.c.l.b16 %v434
        %v481 = vunpack.c.h.b16 %v434
        %v482 = vunpack.c.l.b16 %v435
        %v483 = vunpack.c.h.b16 %v435
        %v484 = vunpack.c.l.b16 %v436
        %v485 = vunpack.c.h.b16 %v436
        %v486 = vunpack.c.l.b16 %v437
        %v487 = vunpack.c.h.b16 %v437
        %v488 = vunpack.c.l.b16 %v438
        %v489 = vunpack.c.h.b16 %v438
        %v490 = vunpack.c.l.b16 %v439
        %v491 = vunpack.c.h.b16 %v439
        %v492 = vunpack.c.l.b16 %v440
        %v493 = vunpack.c.h.b16 %v440
        %v494 = vunpack.c.l.b16 %v441
        %v495 = vunpack.c.h.b16 %v441
        %v496 = vunpack.c.l.b16 %v442
        %v497 = vunpack.c.h.b16 %v442
        %v498 = vunpack.c.l.b16 %v443
        %v499 = vunpack.c.h.b16 %v443
        %v500 = vunpack.c.l.b16 %v444
        %v501 = vunpack.c.h.b16 %v444
        %v502 = vunpack.c.l.b16 %v445
        %v503 = vunpack.c.h.b16 %v445
        %v504 = vunpack.c.l.b16 %v446
        %v505 = vunpack.c.h.b16 %v446
        %v506 = vunpack.c.l.b16 %v447
        %v507 = vunpack.c.h.b16 %v447
        %v508 = vunpack.c.l.b16 %v448
        %v509 = vunpack.c.h.b16 %v448
        %v510 = vpack.c.b16 %v480, %v478
        %v511 = vpack.c.b16 %v481, %v479
        %v512 = vpack.c.b16 %v484, %v482
        %v513 = vpack.c.b16 %v485, %v483
        %v514 = vpack.c.b16 %v488, %v486
        %v515 = vpack.c.b16 %v489, %v487
        %v516 = vpack.c.b16 %v492, %v490
        %v517 = vpack.c.b16 %v493, %v491
        %v518 = vpack.c.b16 %v496, %v494
        %v519 = vpack.c.b16 %v497, %v495
        %v520 = vpack.c.b16 %v500, %v498
        %v521 = vpack.c.b16 %v501, %v499
        %v522 = vpack.c.b16 %v504, %v502
        %v523 = vpack.c.b16 %v505, %v503
        %v524 = vpack.c.b16 %v508, %v506
        %v525 = vpack.c.b16 %v509, %v507
        %542 = vmatprep.subr.bf16.mxu0 %v511
        %543 = vmatpush1.bf16.msra.mxu0 %v510
        %544 = vmatprep.subr.bf16.mxu0 %v513
        %545 = vmatpush1.bf16.msra.mxu0 %v512
        %546 = vmatprep.subr.bf16.mxu0 %v515
        %547 = vmatpush1.bf16.msra.mxu0 %v514
        %548 = vmatprep.subr.bf16.mxu0 %v517
        %549 = vmatpush1.bf16.msra.mxu0 %v516
        %550 = vmatprep.subr.bf16.mxu0 %v519
        %551 = vmatpush1.bf16.msra.mxu0 %v518
        %552 = vmatprep.subr.bf16.mxu0 %v521
        %553 = vmatpush1.bf16.msra.mxu0 %v520
        %554 = vmatprep.subr.bf16.mxu0 %v523
        %555 = vmatpush1.bf16.msra.mxu0 %v522
        %556 = vmatprep.subr.bf16.mxu0 %v525
        %557 = vmatpush1.bf16.msra.mxu0 %v524
        %558 = vmatprep.subr.bf16.mxu0 0
        %559 = vmatpush1.bf16.msra.mxu0 0
        %560 = vmatprep.subr.bf16.mxu0 0
        %561 = vmatpush1.bf16.msra.mxu0 0
        %562 = vmatprep.subr.bf16.mxu0 0
        %563 = vmatpush1.bf16.msra.mxu0 0
        %564 = vmatprep.subr.bf16.mxu0 0
        %565 = vmatpush1.bf16.msra.mxu0 0
        %566 = vmatprep.subr.bf16.mxu0 0
        %567 = vmatpush1.bf16.msra.mxu0 0
        %568 = vmatprep.subr.bf16.mxu0 0
        %569 = vmatpush1.bf16.msra.mxu0 0
        %570 = vmatprep.subr.bf16.mxu0 0
        %571 = vmatpush1.bf16.msra.mxu0 0
        %572 = vmatprep.subr.bf16.mxu0 0
        %573 = vmatpush1.bf16.msra.mxu0 0
        %574 = vmatprep.mubr.bf16.mxu0 0
        %575 = vmatmul.mubr.bf16.gmra.mrb[0].mxu0 %v431
        %v576 = vpop.f32.mrb[0].mxu0
        %v577 = vadd.f32 %v455, %v576
        %v578 = vpop.f32.mrb[0].mxu0
        %v579 = vadd.f32 %v459, %v578
        %v580 = vpop.f32.mrb[0].mxu0
        %v581 = vadd.f32 %v455, %v580
        %v582 = vpop.f32.mrb[0].mxu0
        %v583 = vadd.f32 %v459, %v582
        %584 = vdwg.mxu0
        %v585 = vmax.f32 %v577, 0.0
        %v586 = vmax.f32 %v579, 0.0
        %v587 = vmax.f32 %v581, 0.0
        %v588 = vmax.f32 %v583, 0.0
        %s589 = scalar_lea.vmem [#allocation5], 384
        %v590 = vld [vmem:[%s589] sm:$0xff]
        %v591 = vld [vmem:[%s589 + $0x8] sm:$0xff]
        %v592 = vld [vmem:[%s589 + $0x10] sm:$0xff]
        %v593 = vld [vmem:[%s589 + $0x18] sm:$0xff]
        %v594 = vld [vmem:[%s589 + $0x20] sm:$0xff]
        %v595 = vld [vmem:[%s589 + $0x28] sm:$0xff]
        %v596 = vld [vmem:[%s589 + $0x30] sm:$0xff]
        %v597 = vld [vmem:[%s589 + $0x38] sm:$0xff]
        %v606 = vunpack.c.l.b16 %v590
        %v607 = vunpack.c.h.b16 %v590
        %v608 = vunpack.c.l.b16 %v591
        %v609 = vunpack.c.h.b16 %v591
        %v610 = vunpack.c.l.b16 %v592
        %v611 = vunpack.c.h.b16 %v592
        %v612 = vunpack.c.l.b16 %v593
        %v613 = vunpack.c.h.b16 %v593
        %v614 = vunpack.c.l.b16 %v594
        %v615 = vunpack.c.h.b16 %v594
        %v616 = vunpack.c.l.b16 %v595
        %v617 = vunpack.c.h.b16 %v595
        %v618 = vunpack.c.l.b16 %v596
        %v619 = vunpack.c.h.b16 %v596
        %v620 = vunpack.c.l.b16 %v597
        %v621 = vunpack.c.h.b16 %v597
        %v622 = vpack.c.b16 %v608, %v606
        %v623 = vpack.c.b16 %v609, %v607
        %v624 = vpack.c.b16 %v612, %v610
        %v625 = vpack.c.b16 %v613, %v611
        %v626 = vpack.c.b16 %v616, %v614
        %v627 = vpack.c.b16 %v617, %v615
        %v628 = vpack.c.b16 %v620, %v618
        %v629 = vpack.c.b16 %v621, %v619
        %638 = vmatprep.subr.bf16.mxu0 %v623
        %639 = vmatpush1.bf16.msra.mxu0 %v622
        %640 = vmatprep.subr.bf16.mxu0 %v625
        %641 = vmatpush1.bf16.msra.mxu0 %v624
        %642 = vmatprep.subr.bf16.mxu0 %v627
        %643 = vmatpush1.bf16.msra.mxu0 %v626
        %644 = vmatprep.subr.bf16.mxu0 %v629
        %645 = vmatpush1.bf16.msra.mxu0 %v628
        %646 = vmatprep.subr.bf16.mxu0 0
        %647 = vmatpush1.bf16.msra.mxu0 0
        %648 = vmatprep.subr.bf16.mxu0 0
        %649 = vmatpush1.bf16.msra.mxu0 0
        %650 = vmatprep.subr.bf16.mxu0 0
        %651 = vmatpush1.bf16.msra.mxu0 0
        %652 = vmatprep.subr.bf16.mxu0 0
        %653 = vmatpush1.bf16.msra.mxu0 0
        %654 = vmatprep.subr.bf16.mxu0 0
        %655 = vmatpush1.bf16.msra.mxu0 0
        %656 = vmatprep.subr.bf16.mxu0 0
        %657 = vmatpush1.bf16.msra.mxu0 0
        %658 = vmatprep.subr.bf16.mxu0 0
        %659 = vmatpush1.bf16.msra.mxu0 0
        %660 = vmatprep.subr.bf16.mxu0 0
        %661 = vmatpush1.bf16.msra.mxu0 0
        %662 = vmatprep.subr.bf16.mxu0 0
        %663 = vmatpush1.bf16.msra.mxu0 0
        %664 = vmatprep.subr.bf16.mxu0 0
        %665 = vmatpush1.bf16.msra.mxu0 0
        %666 = vmatprep.subr.bf16.mxu0 0
        %667 = vmatpush1.bf16.msra.mxu0 0
        %668 = vmatprep.subr.bf16.mxu0 0
        %669 = vmatpush1.bf16.msra.mxu0 0
        %670 = vmatprep.mubr.bf16.mxu0 0
        %671 = vmatmul.mubr.bf16.gmra.mrb[0].mxu0 %v269
        %v672 = vpop.f32.mrb[0].mxu0
        %v673 = vadd.f32 0.0, %v672
        %v674 = vpop.f32.mrb[0].mxu0
        %v675 = vadd.f32 0.0, %v674
        %v676 = vpop.f32.mrb[0].mxu0
        %v677 = vadd.f32 0.0, %v676
        %v678 = vpop.f32.mrb[0].mxu0
        %v679 = vadd.f32 0.0, %v678
        %680 = vdwg.mxu0
        %v681 = vadd.f32 %v585, %v673
        %v682 = vadd.f32 %v586, %v675
        %v683 = vadd.f32 %v587, %v677
        %v684 = vadd.f32 %v588, %v679
        %s685 = scalar_lea.vmem [#allocation7], 6
        %v686 = vld [vmem:[%s685] sm:$0x3]
        %v688 = vlaneseq
        %v689 = vshrl.u32 %v688, 7
        %v690 = vsub.s32 0, %v689
        %v691 = vrot.slane %v686, %v690
        %v692 = vlaneseq
        %v693 = vshrl.u32 %v692, 7
        %v694 = vsub.s32 1, %v693
        %v695 = vrot.slane %v686, %v694
        %v698 = vadd.f32 %v681, %v691
        %v699 = vadd.f32 %v682, %v695
        %v700 = vadd.f32 %v683, %v691
        %v701 = vadd.f32 %v684, %v695
        %v702 = vmax.f32 %v698, 0.0
        %v703 = vmax.f32 %v699, 0.0
        %v704 = vmax.f32 %v700, 0.0
        %v705 = vmax.f32 %v701, 0.0
        %706 = vst [vmem:[%s217] sm:$0xff] %v702
        %707 = vst [vmem:[%s217 + $0x8] sm:$0xff] %v703
        %708 = vst [vmem:[%s217 + $0x10] sm:$0xff] %v704
        %709 = vst [vmem:[%s217 + $0x18] sm:$0xff] %v705
        %s710 = sand.u32 %s97, 1
        %s711 = scalar_lea.sflag [#allocation4], %s710
        %s712 = sand.u32 %s97, 1
        %s713 = smul.addr %s712, 32
        %s714 = scalar_lea.vmem [#allocation8], %s713
        // Predicated region
        $region45: #{tpu_custom_call.1} parent=31 // pred_check
          %p715 = pneg %p107
        $region46: #{tpu_custom_call.1} parent=31 // pred_check_branch
          %717 = sbr.rel (%p715) target = $region48
        $region47: #{tpu_custom_call.1} parent=31 // pred_region
          %s718 = smul.u32 2, %s21
          %s720 = ssub.s32 512, 512
          %721 = vsyncadd %s711, %s720
          %s722 = smul.addr %s718, 2
          %s723 = smul.addr %s722, 128
          %s724 = scalar_lea.hbm %s3, %s723
          %s725 = sshll.u32 %s714, 4
          %s726 = int_to_ptr.vmem [resolvable:$true] %s725
          %731 = dma.vmem_to_hbm [thread:$0]  %s726, 512, %s724, %s711, 256, 256, 16
        $region48: #{tpu_custom_call.1} parent=31 // pred_fallthru
          _
      $region32: #{tpu_custom_call.1} parent=5 // pred_fallthru
        _
      %p732 = scmp.le.s32.totalorder 2, %s16
      // Predicated region
      $region49: #{tpu_custom_call.1} parent=5 // pred_check
        %p733 = pneg %p732
      $region50: #{tpu_custom_call.1} parent=5 // pred_check_branch
        %735 = sbr.rel (%p733) target = $region52
      $region51: #{tpu_custom_call.1} parent=5 // pred_region
        %s736 = ssub.s32 %s16, 2
        // Predicated region
        $region53: #{tpu_custom_call.1} parent=51 // pred_check
          %p737 = pneg %p113
        $region54: #{tpu_custom_call.1} parent=51 // pred_check_branch
          %739 = sbr.rel (%p737) target = $region56
        $region55: #{tpu_custom_call.1} parent=51 // pred_region
          %s740 = sand.u32 %s98, 1
          %s741 = scalar_lea.sflag [#allocation4], %s740
          %s742 = sand.u32 %s98, 1
          %s743 = smul.addr %s742, 32
          %s744 = scalar_lea.vmem [#allocation8], %s743
          %745 = dma.done %s741, 512
        $region56: #{tpu_custom_call.1} parent=51 // pred_fallthru
          _
      $region52: #{tpu_custom_call.1} parent=5 // pred_fallthru
        _
    $region6: #{tpu_custom_call.1} parent=1 // loop_footer
      %s20 = sadd.s32 1, %s16
    $region7: #{tpu_custom_call.1} parent=1 // loop_footer_branch
      %15 = sbr.rel target = $region3
    $region8: #{tpu_custom_call.1} parent=1 // loop_exit
      _
    %746 = vsyncpa [#allocation3], 1
    %s747 = scalar_lea.sflag [#allocation3], 1
    %748 = vsyncpa %s747, 1
    %749 = vsyncpa [#allocation6], 1
    %750 = vsyncpa [#allocation4], 1
    %s751 = scalar_lea.sflag [#allocation4], 1
    %752 = vsyncpa %s751, 1

</llo_original>
